<compile_context>
chip_gen: v6e
topology: v6e:2x2x1
jax: 0.10.0
libtpu: 0.0.40
codegen_flags: <defaults>
</compile_context>

<pallas_src>
import functools

import jax
import jax.numpy as jnp
from jax import lax
from jax.experimental import pallas as pl
from jax.experimental.pallas import tpu as pltpu

XENT = 0.1                              # module's `xent` hyper-parameter
NUM_SLICES = 2                          # leading "parallel" grid axis
VMEM_BUDGET_BYTES = 12 * 1024 * 1024    # per-step footprint target (safe on v5e/v6e/v7x)
MAX_TILE_N = 4096


def _round_up(v, m):
    return (v + m - 1) // m * m


def _auto_tile_n(n, c, itemsize, num_slices):
    # 2x double-buffered input tile + ~4x f32 working set (x, gather-select, xn, exp(xn))
    per_row = c * (2 * itemsize + 4 * 4) + 64
    tile = VMEM_BUDGET_BYTES // per_row
    rows_per_slice = -(-n // num_slices)
    tile = min(int(tile), MAX_TILE_N, _round_up(rows_per_slice, 8))
    return max(8, (tile // 8) * 8)


def _cosine_loss_kernel(x_ref, t_ref, out_ref, acc_cos_ref, acc_cent_ref,
                        *, n_true, tile_n, tiles_per_slice, needs_mask):
    p = pl.program_id(0)          # slice (TensorCore) index
    i = pl.program_id(1)          # batch-tile index within the slice

    @pl.when(i == 0)
    def _init():
        acc_cos_ref[...] = jnp.zeros_like(acc_cos_ref)
        acc_cent_ref[...] = jnp.zeros_like(acc_cent_ref)

    x = x_ref[...].astype(jnp.float32)            # (tile_n, C), cast after DMA
    t = t_ref[...]                                # (tile_n, 1) int32
    tn, c = x.shape

    # target-logit gather: compare + select (cheaper than onehot cast+mul)
    col = lax.broadcasted_iota(jnp.int32, (tn, c), 1)
    x_tgt = jnp.sum(jnp.where(col == t, x, 0.0), axis=-1, keepdims=True)   # (tile_n, 1)

    # per-row 1/||x||: rsqrt on the EUP, eps clamps applied to the squared norm
    sq = jnp.sum(x * x, axis=-1, keepdims=True)                           # (tile_n, 1)
    inv_cos = lax.rsqrt(jnp.maximum(sq, 1e-16))   # cosine_similarity eps = 1e-8 on the norm
    inv_nrm = lax.rsqrt(jnp.maximum(sq, 1e-24))   # F.normalize eps = 1e-12 on the norm

    # cosine term: cos(x, onehot) = x[i, t_i] / max(||x_i||, eps)  (||onehot|| = 1)
    cos = x_tgt * inv_cos                                                  # (tile_n, 1)

    # cross-entropy on F.normalize(x): xn in [-1, 1] -> LSE needs no max shift
    xn = x * inv_nrm                                                       # (tile_n, C)
    lse = jnp.log(jnp.sum(jnp.exp(xn), axis=-1, keepdims=True))
    cent = lse - x_tgt * inv_nrm                                           # (tile_n, 1)

    if needs_mask:
        # Rows past the true batch size (partial / clamped-duplicate tiles) may be
        # garbage (NaN/Inf). Select on the per-row partials is NaN-safe and only
        # costs per-row work; skipped entirely at trace time when N tiles evenly.
        row0 = (p * tiles_per_slice + i) * tile_n
        row = lax.broadcasted_iota(jnp.int32, (tn, 1), 0) + row0
        valid = row < n_true
        cos = jnp.where(valid, cos, 0.0)
        cent = jnp.where(valid, cent, 0.0)

    acc_cos_ref[...] += jnp.sum(cos, axis=0, keepdims=True)
    acc_cent_ref[...] += jnp.sum(cent, axis=0, keepdims=True)

    @pl.when(i == pl.num_programs(1) - 1)
    def _finalize():
        inv_n = jnp.float32(1.0 / n_true)
        # per-slice partial of (loss - 1); combined (and +1) in the wrapper
        partial = (XENT * acc_cent_ref[...] - acc_cos_ref[...]) * inv_n    # (1, 1)
        out_ref[...] = jnp.broadcast_to(partial, out_ref.shape)


@functools.partial(jax.jit, static_argnames=("tile_n", "num_slices"))
def cosine_loss(x, target, tile_n=None, num_slices=NUM_SLICES):
    """x: (N, C) float logits (bf16 recommended; any float dtype works),
    target: (N,) int labels -> scalar loss (reduction='mean')."""
    n, c = x.shape
    itemsize = jnp.dtype(x.dtype).itemsize

    if tile_n is None:
        tile = _auto_tile_n(n, c, itemsize, num_slices)
    else:
        tile = min(int(tile_n), _round_up(-(-n // num_slices), 8))
        tile = max(8, (tile // 8) * 8)

    n_blocks = pl.cdiv(n, tile)
    tiles_per_slice = pl.cdiv(n_blocks, num_slices)
    needs_mask = (num_slices * tiles_per_slice * tile) != n
    max_block = n_blocks - 1

    t2d = target.astype(jnp.int32).reshape(n, 1)

    # Clamp the logical block index so a slice's trailing (fully out-of-bounds)
    # steps re-read the last valid block; their rows are masked in-kernel.
    def in_map(p, i):
        return (jnp.minimum(p * tiles_per_slice + i, max_block), 0)

    kernel = functools.partial(
        _cosine_loss_kernel, n_true=n, tile_n=tile,
        tiles_per_slice=tiles_per_slice, needs_mask=needs_mask)

    out = pl.pallas_call(
        kernel,
        # (8, 128)-aligned per-slice partial blocks (tiny; layout-safe everywhere)
        out_shape=jax.ShapeDtypeStruct((num_slices * 8, 128), jnp.float32),
        grid=(num_slices, tiles_per_slice),
        in_specs=[
            pl.BlockSpec((tile, c), in_map),              # x tile (native dtype)
            pl.BlockSpec((tile, 1), in_map),              # labels tile
        ],
        out_specs=pl.BlockSpec((8, 128), lambda p, i: (p, 0)),
        scratch_shapes=[
            pltpu.VMEM((1, 1), jnp.float32),              # per-slice sum(cos)
            pltpu.VMEM((1, 1), jnp.float32),              # per-slice sum(lse - xn_tgt)
        ],
        compiler_params=pltpu.CompilerParams(
            dimension_semantics=("parallel", "arbitrary"),
            vmem_limit_bytes=32 * 1024 * 1024,
        ),
    )(x, t2d)

    partials = out.reshape(num_slices, 8, 128)[:, 0, 0]
    return 1.0 + jnp.sum(partials)


def _reference(x, target):
    # pure-JAX reference of the PyTorch forward (for sanity check)
    x = x.astype(jnp.float32)
    c = x.shape[-1]
    oh = jax.nn.one_hot(target, c, dtype=jnp.float32)
    row_norm = jnp.sqrt(jnp.sum(x * x, axis=-1, keepdims=True))
    cos = jnp.sum(x * oh, axis=-1, keepdims=True) / jnp.maximum(row_norm, 1e-8)
    cosine_loss_ = jnp.mean(1.0 - cos)
    xn = x / jnp.maximum(row_norm, 1e-12)
    logp = jax.nn.log_softmax(xn, axis=-1)
    cent_loss = jnp.mean(-jnp.sum(logp * oh, axis=-1))
    return cosine_loss_ + XENT * cent_loss


if __name__ == "__main__":
    key = jax.random.PRNGKey(0)
    k1, k2, k3, k4 = jax.random.split(key, 4)

    # --- small single-block case (auto tile; second slice fully masked) ----
    N1, C1 = 8, 32
    x1 = jax.random.normal(k1, (N1, C1), dtype=jnp.float32)
    t1 = jax.random.randint(k2, (N1,), 0, C1, dtype=jnp.int32)
    loss1 = cosine_loss(x1, t1)
    jax.block_until_ready(loss1)
    ref1 = _reference(x1, t1)
    assert jnp.allclose(loss1, ref1, atol=1e-4, rtol=1e-4), (loss1, ref1)

    # --- multi-tile case: partial last tile + clamped duplicate tile, bf16 --
    N2, C2 = 40, 160
    x2 = jax.random.normal(k3, (N2, C2), dtype=jnp.float32).astype(jnp.bfloat16)
    t2 = jax.random.randint(k4, (N2,), 0, C2, dtype=jnp.int32)
    loss2 = cosine_loss(x2, t2, tile_n=16)        # grid = (2, 2), masking active
    jax.block_until_ready(loss2)
    ref2 = _reference(x2, t2)
    assert jnp.allclose(loss2, ref2, atol=1e-4, rtol=1e-4), (loss2, ref2)

    print("KERNEL_OK")
</pallas_src>

<mosaic_0001>
module attributes {stable_mosaic.version = 11 : i64} {
  func.func @_cosine_loss_kernel(%arg0: i32, %arg1: i32, %arg2: memref<8x32xf32, #tpu.memory_space<vmem>>, %arg3: memref<8x1xi32, #tpu.memory_space<vmem>>, %arg4: memref<8x128xf32, #tpu.memory_space<vmem>>, %arg5: memref<1x1xf32, #tpu.memory_space<vmem>>, %arg6: memref<1x1xf32, #tpu.memory_space<vmem>>) attributes {dimension_semantics = [#tpu.dimension_semantics<parallel>, #tpu.dimension_semantics<arbitrary>], iteration_bounds = array<i64: 2, 1>, scalar_prefetch = 0 : i64, scratch_operands = 2 : i64, tpu.core_type = #tpu.core_type<tc>, window_params = [{transform_indices = @transform_0, window_bounds = array<i64: 8, 32>}, {transform_indices = @transform_1, window_bounds = array<i64: 8, 1>}, {transform_indices = @transform_2, window_bounds = array<i64: 8, 128>}]} {
    %c0_i32 = arith.constant 0 : i32
    %0 = arith.cmpi eq, %arg1, %c0_i32 : i32
    %1 = arith.extui %0 : i1 to i32
    %c0_i32_0 = arith.constant 0 : i32
    %2 = arith.cmpi ne, %1, %c0_i32_0 : i32
    scf.if %2 {
      %cst_24 = arith.constant 0.000000e+00 : f32
      %55 = vector.broadcast %cst_24 : f32 to vector<1x1xf32>
      %c0_25 = arith.constant 0 : index
      %c0_26 = arith.constant 0 : index
      %56 = vector.load %arg5[%c0_25, %c0_26] : memref<1x1xf32, #tpu.memory_space<vmem>>, vector<1x1xf32>
      tpu.vector_store %arg5[%c0_25, %c0_26], %55 {strides = array<i32>} : memref<1x1xf32, #tpu.memory_space<vmem>>, vector<1x1xf32>,
      %cst_27 = arith.constant 0.000000e+00 : f32
      %57 = vector.broadcast %cst_27 : f32 to vector<1x1xf32>
      %c0_28 = arith.constant 0 : index
      %c0_29 = arith.constant 0 : index
      %58 = vector.load %arg6[%c0_28, %c0_29] : memref<1x1xf32, #tpu.memory_space<vmem>>, vector<1x1xf32>
      tpu.vector_store %arg6[%c0_28, %c0_29], %57 {strides = array<i32>} : memref<1x1xf32, #tpu.memory_space<vmem>>, vector<1x1xf32>,
    } else {
    }
    %c0 = arith.constant 0 : index
    %c0_1 = arith.constant 0 : index
    %3 = vector.load %arg2[%c0, %c0_1] : memref<8x32xf32, #tpu.memory_space<vmem>>, vector<8x32xf32>
    %c0_2 = arith.constant 0 : index
    %c0_3 = arith.constant 0 : index
    %4 = vector.load %arg3[%c0_2, %c0_3] : memref<8x1xi32, #tpu.memory_space<vmem>>, vector<8x1xi32>
    %5 = tpu.iota {dimensions = array<i32: 1>} : vector<8x32xi32>
    %6 = vector.broadcast %4 : vector<8x1xi32> to vector<8x32xi32>
    %7 = arith.cmpi eq, %5, %6 : vector<8x32xi32>
    %cst = arith.constant 0.000000e+00 : f32
    %8 = vector.broadcast %cst : f32 to vector<8x32xf32>
    %9 = arith.select %7, %3, %8 : vector<8x32xi1>, vector<8x32xf32>
    %cst_4 = arith.constant dense<0.000000e+00> : vector<8xf32>
    %10 = vector.multi_reduction <add>, %9, %cst_4 [1] : vector<8x32xf32> to vector<8xf32>
    %11 = vector.shape_cast %10 : vector<8xf32> to vector<8x1xf32>
    %12 = arith.mulf %3, %3 : vector<8x32xf32>
    %cst_5 = arith.constant dense<0.000000e+00> : vector<8xf32>
    %13 = vector.multi_reduction <add>, %12, %cst_5 [1] : vector<8x32xf32> to vector<8xf32>
    %14 = vector.shape_cast %13 : vector<8xf32> to vector<8x1xf32>
    %cst_6 = arith.constant 1.000000e-16 : f32
    %15 = vector.broadcast %cst_6 : f32 to vector<8x1xf32>
    %16 = arith.maximumf %14, %15 : vector<8x1xf32>
    %17 = math.rsqrt %16 : vector<8x1xf32>
    %cst_7 = arith.constant 1.000000e-24 : f32
    %18 = vector.broadcast %cst_7 : f32 to vector<8x1xf32>
    %19 = arith.maximumf %14, %18 : vector<8x1xf32>
    %20 = math.rsqrt %19 : vector<8x1xf32>
    %21 = arith.mulf %11, %17 : vector<8x1xf32>
    %22 = vector.broadcast %20 : vector<8x1xf32> to vector<8x32xf32>
    %23 = arith.mulf %3, %22 : vector<8x32xf32>
    %24 = math.exp %23 : vector<8x32xf32>
    %cst_8 = arith.constant dense<0.000000e+00> : vector<8xf32>
    %25 = vector.multi_reduction <add>, %24, %cst_8 [1] : vector<8x32xf32> to vector<8xf32>
    %26 = vector.shape_cast %25 : vector<8xf32> to vector<8x1xf32>
    %27 = math.log %26 : vector<8x1xf32>
    %28 = arith.mulf %11, %20 : vector<8x1xf32>
    %29 = arith.subf %27, %28 : vector<8x1xf32>
    %c1_i32 = arith.constant 1 : i32
    %30 = arith.muli %arg0, %c1_i32 : i32
    %31 = arith.addi %30, %arg1 : i32
    %c8_i32 = arith.constant 8 : i32
    %32 = arith.muli %31, %c8_i32 : i32
    %33 = tpu.iota {dimensions = array<i32: 0>} : vector<8x1xi32>
    %34 = vector.broadcast %32 : i32 to vector<8x1xi32>
    %35 = arith.addi %33, %34 : vector<8x1xi32>
    %c8_i32_9 = arith.constant 8 : i32
    %36 = vector.broadcast %c8_i32_9 : i32 to vector<8x1xi32>
    %37 = arith.cmpi slt, %35, %36 : vector<8x1xi32>
    %cst_10 = arith.constant 0.000000e+00 : f32
    %38 = vector.broadcast %cst_10 : f32 to vector<8x1xf32>
    %39 = arith.select %37, %21, %38 : vector<8x1xi1>, vector<8x1xf32>
    %cst_11 = arith.constant 0.000000e+00 : f32
    %40 = vector.broadcast %cst_11 : f32 to vector<8x1xf32>
    %41 = arith.select %37, %29, %40 : vector<8x1xi1>, vector<8x1xf32>
    %c0_12 = arith.constant 0 : index
    %c0_13 = arith.constant 0 : index
    %42 = vector.load %arg5[%c0_12, %c0_13] : memref<1x1xf32, #tpu.memory_space<vmem>>, vector<1x1xf32>
    %cst_14 = arith.constant dense<0.000000e+00> : vector<1xf32>
    %43 = vector.multi_reduction <add>, %39, %cst_14 [0] : vector<8x1xf32> to vector<1xf32>
    %44 = vector.shape_cast %43 : vector<1xf32> to vector<1x1xf32>
    %45 = arith.addf %42, %44 : vector<1x1xf32>
    %c0_15 = arith.constant 0 : index
    %c0_16 = arith.constant 0 : index
    %46 = vector.load %arg5[%c0_15, %c0_16] : memref<1x1xf32, #tpu.memory_space<vmem>>, vector<1x1xf32>
    tpu.vector_store %arg5[%c0_15, %c0_16], %45 {strides = array<i32>} : memref<1x1xf32, #tpu.memory_space<vmem>>, vector<1x1xf32>,
    %c0_17 = arith.constant 0 : index
    %c0_18 = arith.constant 0 : index
    %47 = vector.load %arg6[%c0_17, %c0_18] : memref<1x1xf32, #tpu.memory_space<vmem>>, vector<1x1xf32>
    %cst_19 = arith.constant dense<0.000000e+00> : vector<1xf32>
    %48 = vector.multi_reduction <add>, %41, %cst_19 [0] : vector<8x1xf32> to vector<1xf32>
    %49 = vector.shape_cast %48 : vector<1xf32> to vector<1x1xf32>
    %50 = arith.addf %47, %49 : vector<1x1xf32>
    %c0_20 = arith.constant 0 : index
    %c0_21 = arith.constant 0 : index
    %51 = vector.load %arg6[%c0_20, %c0_21] : memref<1x1xf32, #tpu.memory_space<vmem>>, vector<1x1xf32>
    tpu.vector_store %arg6[%c0_20, %c0_21], %50 {strides = array<i32>} : memref<1x1xf32, #tpu.memory_space<vmem>>, vector<1x1xf32>,
    %c0_i32_22 = arith.constant 0 : i32
    %52 = arith.cmpi eq, %arg1, %c0_i32_22 : i32
    %53 = arith.extui %52 : i1 to i32
    %c0_i32_23 = arith.constant 0 : i32
    %54 = arith.cmpi ne, %53, %c0_i32_23 : i32
    scf.if %54 {
      %c0_24 = arith.constant 0 : index
      %c0_25 = arith.constant 0 : index
      %55 = vector.load %arg6[%c0_24, %c0_25] : memref<1x1xf32, #tpu.memory_space<vmem>>, vector<1x1xf32>
      %cst_26 = arith.constant 1.000000e-01 : f32
      %56 = vector.broadcast %cst_26 : f32 to vector<1x1xf32>
      %57 = arith.mulf %56, %55 : vector<1x1xf32>
      %c0_27 = arith.constant 0 : index
      %c0_28 = arith.constant 0 : index
      %58 = vector.load %arg5[%c0_27, %c0_28] : memref<1x1xf32, #tpu.memory_space<vmem>>, vector<1x1xf32>
      %59 = arith.subf %57, %58 : vector<1x1xf32>
      %cst_29 = arith.constant 1.250000e-01 : f32
      %60 = vector.broadcast %cst_29 : f32 to vector<1x1xf32>
      %61 = arith.mulf %59, %60 : vector<1x1xf32>
      %62 = vector.shape_cast %61 : vector<1x1xf32> to vector<1x1xf32>
      %63 = vector.broadcast %62 : vector<1x1xf32> to vector<8x128xf32>
      %c0_30 = arith.constant 0 : index
      %c0_31 = arith.constant 0 : index
      %64 = vector.load %arg4[%c0_30, %c0_31] : memref<8x128xf32, #tpu.memory_space<vmem>>, vector<8x128xf32>
      tpu.vector_store %arg4[%c0_30, %c0_31], %63 {strides = array<i32>} : memref<8x128xf32, #tpu.memory_space<vmem>>, vector<8x128xf32>,
    } else {
    }
    return
  }
  func.func @transform_0(%arg0: i32, %arg1: i32) -> (i32, i32) {
    %c1_i32 = arith.constant 1 : i32
    %0 = arith.muli %arg0, %c1_i32 : i32
    %1 = arith.addi %0, %arg1 : i32
    %c0_i32 = arith.constant 0 : i32
    %2 = arith.minsi %1, %c0_i32 : i32
    %c0_i32_0 = arith.constant 0 : i32
    %c0_i32_1 = arith.constant 0 : i32
    return %2, %c0_i32_0 : i32, i32
  }
  func.func @transform_1(%arg0: i32, %arg1: i32) -> (i32, i32) {
    %c1_i32 = arith.constant 1 : i32
    %0 = arith.muli %arg0, %c1_i32 : i32
    %1 = arith.addi %0, %arg1 : i32
    %c0_i32 = arith.constant 0 : i32
    %2 = arith.minsi %1, %c0_i32 : i32
    %c0_i32_0 = arith.constant 0 : i32
    %c0_i32_1 = arith.constant 0 : i32
    return %2, %c0_i32_0 : i32, i32
  }
  func.func @transform_2(%arg0: i32, %arg1: i32) -> (i32, i32) {
    %c0_i32 = arith.constant 0 : i32
    %c0_i32_0 = arith.constant 0 : i32
    return %arg0, %c0_i32 : i32, i32
  }
}

</mosaic_0001>

<llo_original>
// kernel: cosine_loss.1
$region0: #{cosine_loss.1}
  #allocation0 [shape = 'u32[]', space=smem, size = 0x4, offset = 0x4, fixed_abs, tag = 'smem constant byte address 0x4 - core index']
  #allocation1 [shape = 'u32[144,128]{1,0:T(1,128)}', space=vmem, size = 0x12000, scoped, tag = 'internal scratch']
  #allocation2 [shape = 'f32[1,1]{1,0:T(1,128)}', space=vmem, size = 0x200, scoped, tag = 'scratch operand']
  #allocation3 [shape = 'f32[1,1]{1,0:T(1,128)}', space=vmem, size = 0x200, scoped, tag = 'scratch operand']
  %s0 = inlined_call_operand.vmem [shape: f32[8,32], index: 0, kind: input, shape index: {}]
  %s1 = inlined_call_operand.vmem [shape: s32[8,1], index: 1, kind: input, shape index: {}]
  %s2 = inlined_call_operand.vmem [shape: f32[16,128], index: 2, kind: output, shape index: {}]
  %s3 = sld [smem:[#allocation0]]
  $region49: #{cosine_loss.1} parent=0
    _
  %s5 = ssub.s32 1, %s3
  %s6 = scalar_select 0, %s5, %s3
  loop: start=0, step=1, limit=4
  $region2: #{cosine_loss.1} parent=0 // loop_pre_header
    _
  $region3: #{cosine_loss.1} parent=0 // loop_header
    %s8 = sphi 0, %s12
    %p9 = scmp.ge.s32.totalorder %s8, 4
    %s15 = sphi 0, %s27
    %s16 = sphi 0, %s23
    %s17 = sphi 0, %s15
    %s18 = sphi 0, %s16
    %s19 = sphi 0, %s17
    %s20 = sphi 0, %s18
    %s36 = sphi 0, %s38
    %s39 = sphi 0, %s36
    %s40 = sphi 0, %s39
    %s56 = sphi 0, %s40
    %s68 = sphi 0, %s70
    %s71 = sphi 0, %s68
    %s72 = sphi 0, %s71
    %s88 = sphi 0, %s72
    %s94 = sphi 0, %s96
    %s97 = sphi 0, %s94
    %s98 = sphi 0, %s97
    %s114 = sphi 0, %s98
  $region4: #{cosine_loss.1} parent=0 // loop_header_branch
    %11 = sbr.rel (%p9) target = $region8
  $region5: #{cosine_loss.1} parent=0 // loop_body
    %s13 = ssub.s32 %s8, 1
    %s14 = ssub.s32 %s8, 2
    %s21 = sadd.s32 1, %s16
    %p22 = scmp.ge.s32.totalorder %s21, 1
    %s23 = scalar_select %p22, 0, %s21
    %s24 = sadd.s32 1, %s15
    %s25 = scalar_select %p22, %s24, %s15
    %p26 = scmp.ge.s32.totalorder %s25, 2
    %s27 = scalar_select %p26, 0, %s25
    %s28 = sadd.s32 %s15, %s16
    %p29 = scmp.lt.s32.totalorder %s28, 0
    %s30 = scalar_select %p29, %s28, 0
    %s31 = sadd.s32 %s27, %s23
    %p32 = scmp.lt.s32.totalorder %s31, 0
    %s33 = scalar_select %p32, %s31, 0
    %s34 = ssub.s32 %s30, %s33
    %p35 = scmp.eq.s32.totalorder %s34, 0
    %s37 = sadd.s32 %s36, 1
    %s38 = scalar_select %p35, %s36, %s37
    %p41 = pneg %p35
    %p42 = scmp.eq.s32.totalorder %s8, 1
    %p43 = por %p41, %p42
    %p44 = scmp.ne.s32.totalorder %s36, %s39
    %p45 = scmp.eq.s32.totalorder %s8, 0
    %p46 = por %p44, %p45
    %p47 = scmp.ne.s32.totalorder %s36, %s39
    %p48 = scmp.eq.s32.totalorder %s13, 1
    %p49 = por %p47, %p48
    %p50 = scmp.ne.s32.totalorder %s39, %s40
    %p51 = scmp.eq.s32.totalorder %s13, 0
    %p52 = por %p50, %p51
    %p53 = scmp.ne.s32.totalorder %s39, %s40
    %p54 = scmp.eq.s32.totalorder %s14, 1
    %p55 = por %p53, %p54
    %p57 = scmp.ne.s32.totalorder %s40, %s56
    %p58 = scmp.eq.s32.totalorder %s14, 0
    %p59 = por %p57, %p58
    %s60 = sadd.s32 %s15, %s16
    %p61 = scmp.lt.s32.totalorder %s60, 0
    %s62 = scalar_select %p61, %s60, 0
    %s63 = sadd.s32 %s27, %s23
    %p64 = scmp.lt.s32.totalorder %s63, 0
    %s65 = scalar_select %p64, %s63, 0
    %s66 = ssub.s32 %s62, %s65
    %p67 = scmp.eq.s32.totalorder %s66, 0
    %s69 = sadd.s32 %s68, 1
    %s70 = scalar_select %p67, %s68, %s69
    %p73 = pneg %p67
    %p74 = scmp.eq.s32.totalorder %s8, 1
    %p75 = por %p73, %p74
    %p76 = scmp.ne.s32.totalorder %s68, %s71
    %p77 = scmp.eq.s32.totalorder %s8, 0
    %p78 = por %p76, %p77
    %p79 = scmp.ne.s32.totalorder %s68, %s71
    %p80 = scmp.eq.s32.totalorder %s13, 1
    %p81 = por %p79, %p80
    %p82 = scmp.ne.s32.totalorder %s71, %s72
    %p83 = scmp.eq.s32.totalorder %s13, 0
    %p84 = por %p82, %p83
    %p85 = scmp.ne.s32.totalorder %s71, %s72
    %p86 = scmp.eq.s32.totalorder %s14, 1
    %p87 = por %p85, %p86
    %p89 = scmp.ne.s32.totalorder %s72, %s88
    %p90 = scmp.eq.s32.totalorder %s14, 0
    %p91 = por %p89, %p90
    %s92 = ssub.s32 %s15, %s27
    %p93 = scmp.eq.s32.totalorder %s92, 0
    %s95 = sadd.s32 %s94, 1
    %s96 = scalar_select %p93, %s94, %s95
    %p99 = pneg %p93
    %p100 = scmp.eq.s32.totalorder %s8, 1
    %p101 = por %p99, %p100
    %p102 = scmp.ne.s32.totalorder %s94, %s97
    %p103 = scmp.eq.s32.totalorder %s8, 0
    %p104 = por %p102, %p103
    %p105 = scmp.ne.s32.totalorder %s94, %s97
    %p106 = scmp.eq.s32.totalorder %s13, 1
    %p107 = por %p105, %p106
    %p108 = scmp.ne.s32.totalorder %s97, %s98
    %p109 = scmp.eq.s32.totalorder %s13, 0
    %p110 = por %p108, %p109
    %p111 = scmp.ne.s32.totalorder %s97, %s98
    %p112 = scmp.eq.s32.totalorder %s14, 1
    %p113 = por %p111, %p112
    %p115 = scmp.ne.s32.totalorder %s98, %s114
    %p116 = scmp.eq.s32.totalorder %s14, 0
    %p117 = por %p115, %p116
    %p118 = scmp.le.s32.totalorder 1, %s8
    %p119 = scmp.lt.s32.totalorder %s8, 3
    %p120 = pnand %p118, %p119
    %p121 = pneg %p120
    // Predicated region
    $region9: #{cosine_loss.1} parent=5 // pred_check
      _
    $region10: #{cosine_loss.1} parent=5 // pred_check_branch
      %123 = sbr.rel (%p120) target = $region12
    $region11: #{cosine_loss.1} parent=5 // pred_region
      %s124 = ssub.s32 %s8, 1
    $region12: #{cosine_loss.1} parent=5 // pred_fallthru
      _
    %p125 = scmp.lt.s32.totalorder %s8, 2
    // Predicated region
    $region13: #{cosine_loss.1} parent=5 // pred_check
      %p126 = pneg %p125
    $region14: #{cosine_loss.1} parent=5 // pred_check_branch
      %128 = sbr.rel (%p126) target = $region16
    $region15: #{cosine_loss.1} parent=5 // pred_region
      // Predicated region
      $region17: #{cosine_loss.1} parent=15 // pred_check
        %p129 = pneg %p46
      $region18: #{cosine_loss.1} parent=15 // pred_check_branch
        %131 = sbr.rel (%p129) target = $region20
      $region19: #{cosine_loss.1} parent=15 // pred_region
        %s132 = sadd.s32 %s15, %s16
        %p133 = scmp.lt.s32.totalorder %s132, 0
        %s134 = scalar_select %p133, %s132, 0
        %p135 = scmp.lt.s32.totalorder %s134, 0
        %s136 = scalar_select %p135, %s134, 0
        %s137 = smul.addr %s136, 8
        %s138 = scalar_lea.vmem %s0, %s137
        %s139 = sadd.s32 %s15, %s16
        %p140 = scmp.lt.s32.totalorder %s139, 0
        %s141 = scalar_select %p140, %s139, 0
      $region20: #{cosine_loss.1} parent=15 // pred_fallthru
        _
      // Predicated region
      $region21: #{cosine_loss.1} parent=15 // pred_check
        %p142 = pneg %p78
      $region22: #{cosine_loss.1} parent=15 // pred_check_branch
        %144 = sbr.rel (%p142) target = $region24
      $region23: #{cosine_loss.1} parent=15 // pred_region
        %s145 = sadd.s32 %s15, %s16
        %p146 = scmp.lt.s32.totalorder %s145, 0
        %s147 = scalar_select %p146, %s145, 0
        %p148 = scmp.lt.s32.totalorder %s147, 0
        %s149 = scalar_select %p148, %s147, 0
        %s150 = smul.addr %s149, 8
        %s151 = scalar_lea.vmem %s1, %s150
        %s152 = sadd.s32 %s15, %s16
        %p153 = scmp.lt.s32.totalorder %s152, 0
        %s154 = scalar_select %p153, %s152, 0
      $region24: #{cosine_loss.1} parent=15 // pred_fallthru
        _
    $region16: #{cosine_loss.1} parent=5 // pred_fallthru
      _
    %p155 = scmp.le.s32.totalorder 1, %s8
    %p156 = scmp.lt.s32.totalorder %s8, 3
    %p157 = pnand %p155, %p156
    %p158 = pneg %p157
    // Predicated region
    $region25: #{cosine_loss.1} parent=5 // pred_check
      _
    $region26: #{cosine_loss.1} parent=5 // pred_check_branch
      %160 = sbr.rel (%p157) target = $region28
    $region27: #{cosine_loss.1} parent=5 // pred_region
      %s161 = ssub.s32 %s8, 1
      %s162 = sadd.s32 %s17, %s18
      %p163 = scmp.lt.s32.totalorder %s162, 0
      %s164 = scalar_select %p163, %s162, 0
      %p165 = scmp.lt.s32.totalorder %s164, 0
      %s166 = scalar_select %p165, %s164, 0
      %s167 = smul.addr %s166, 8
      %s168 = scalar_lea.vmem %s0, %s167
      %p169 = pneg %p52
      %p170 = pneg %p49
      %s171 = sadd.s32 %s17, %s18
      %p172 = scmp.lt.s32.totalorder %s171, 0
      %s173 = scalar_select %p172, %s171, 0
      %p174 = scmp.lt.s32.totalorder %s173, 0
      %s175 = scalar_select %p174, %s173, 0
      %s176 = smul.addr %s175, 8
      %s177 = scalar_lea.vmem %s1, %s176
      %p178 = pneg %p84
      %p179 = pneg %p81
      %p180 = pneg %p110
      %p181 = pneg %p107
      %p182 = scmp.lt.s32.totalorder %s17, 1
      %s183 = scalar_select %p182, %s17, 1
      %s184 = smul.addr %s183, 8
      %s185 = scalar_lea.vmem %s2, %s184
      %s186 = sadd.s32 %s17, %s18
      %p187 = scmp.lt.s32.totalorder %s186, 0
      %s188 = scalar_select %p187, %s186, 0
      %p189 = scmp.lt.s32.totalorder %s188, 0
      %s190 = scalar_select %p189, %s188, 0
      %s191 = smul.addr %s190, 8
      %s192 = scalar_lea.vmem %s0, %s191
      %s193 = sadd.s32 %s17, %s18
      %p194 = scmp.lt.s32.totalorder %s193, 0
      %s195 = scalar_select %p194, %s193, 0
      %s196 = sadd.s32 %s17, %s18
      %p197 = scmp.lt.s32.totalorder %s196, 0
      %s198 = scalar_select %p197, %s196, 0
      %p199 = scmp.lt.s32.totalorder %s198, 0
      %s200 = scalar_select %p199, %s198, 0
      %s201 = smul.addr %s200, 8
      %s202 = scalar_lea.vmem %s1, %s201
      %s203 = sadd.s32 %s17, %s18
      %p204 = scmp.lt.s32.totalorder %s203, 0
      %s205 = scalar_select %p204, %s203, 0
      %p206 = scmp.lt.s32.totalorder %s17, 1
      %s207 = scalar_select %p206, %s17, 1
      %s208 = smul.addr %s207, 8
      %s209 = scalar_lea.vmem %s2, %s208
      %p210 = scmp.eq.s32.totalorder %s18, 0
      // Predicated region
      $region29: #{cosine_loss.1} parent=27 // pred_check
        %p211 = pneg %p210
      $region30: #{cosine_loss.1} parent=27 // pred_check_branch
        %213 = sbr.rel (%p211) target = $region32
      $region31: #{cosine_loss.1} parent=27 // pred_region
        %vm214 = vcmask 0
        %215 = vst.msk [vmem:[#allocation2] sm:$0x1] %vm214, 0.0
        %216 = vst.msk [vmem:[#allocation3] sm:$0x1] %vm214, 0.0
      $region32: #{cosine_loss.1} parent=27 // pred_fallthru
        _
      %v217 = vld [vmem:[%s192] sm:$0xff]
      %v218 = vld [vmem:[%s202] sm:$0xff]
      %v219 = vlaneseq
      %v220 = vand.u32 %v219, 127
      %221 = vset.pattern.permute.xlu0 0
      %222 = vperm.xlu0 %221, %v218
      %v223 = vpop.permute.xlu0 %222
      %vm224 = vcmp.eq.s32.totalorder %v220, %v223
      %v225 = vsel %vm224, %v217, 0.0
      %vm226 = vcmask 261120
      %v227 = vsel %vm226, %v225, 0.0
      %228 = vadd.xlane.f32.xlu0 %v227
      %v229 = vpop.xlane.xlu0 %228
      %v230 = vmul.f32 %v217, %v217
      %v231 = vsel %vm226, %v230, 0.0
      %232 = vadd.xlane.f32.xlu0 %v231
      %v233 = vpop.xlane.xlu0 %232
      %v234 = vmax.f32 %v233, 1e-16
      %v235 = vrsqrt.pop %v234
      %v236 = vmax.f32 %v233, 1e-24
      %v237 = vrsqrt.pop %v236
      %v238 = vmul.f32 %v229, %v235
      %v239 = vmul.f32 %v217, %v237
      %v240 = vmul.f32 %v239, 1.442695
      %v241 = vpow.pop %v240
      %v242 = vsel %vm226, %v241, 0.0
      %243 = vadd.xlane.f32.xlu0 %v242
      %v244 = vpop.xlane.xlu0 %243
      %v245 = vlog2.pop %v244
      %v246 = vmul.f32 %v245, 0.6931472
      %v247 = vmul.f32 %v229, %v237
      %v248 = vsub.f32 %v246, %v247
      %s249 = sadd.s32 %s17, %s18
      %s250 = smul.u32 %s249, 8
      %v251 = vlaneseq
      %v252 = vshrl.u32 %v251, 7
      %v253 = vstv %s250
      %v254 = vadd.s32 %v252, %v253
      %vm255 = vcmp.lt.s32.totalorder %v254, 8
      %v256 = vsel %vm255, %v238, 0.0
      %v257 = vsel %vm255, %v248, 0.0
      %v258 = vld [vmem:[#allocation2] sm:$0x1]
      %v259 = vrot.slane %v256, 4
      %v260 = vadd.f32 %v256, %v259
      %v261 = vrot.slane %v260, 2
      %v262 = vadd.f32 %v260, %v261
      %v263 = vrot.slane %v262, 1
      %v264 = vadd.f32 %v262, %v263
      %v265 = vadd.f32 %v258, %v264
      %vm266 = vcmask 0
      %267 = vst.msk [vmem:[#allocation2] sm:$0x1] %vm266, %v265
      %v268 = vld [vmem:[#allocation3] sm:$0x1]
      %v269 = vrot.slane %v257, 4
      %v270 = vadd.f32 %v257, %v269
      %v271 = vrot.slane %v270, 2
      %v272 = vadd.f32 %v270, %v271
      %v273 = vrot.slane %v272, 1
      %v274 = vadd.f32 %v272, %v273
      %v275 = vadd.f32 %v268, %v274
      %276 = vst.msk [vmem:[#allocation3] sm:$0x1] %vm266, %v275
      // Predicated region
      $region33: #{cosine_loss.1} parent=27 // pred_check
        %p277 = pneg %p210
      $region34: #{cosine_loss.1} parent=27 // pred_check_branch
        %279 = sbr.rel (%p277) target = $region36
      $region35: #{cosine_loss.1} parent=27 // pred_region
        %v280 = vld [vmem:[#allocation3] sm:$0x1]
        %v281 = vmul.f32 %v280, 0.1
        %v282 = vld [vmem:[#allocation2] sm:$0x1]
        %v283 = vsub.f32 %v281, %v282
        %v284 = vmul.f32 %v283, 0.125
        %v286 = vlaneseq
        %v287 = vshrl.u32 %v286, 7
        %v288 = vsub.s32 0, %v287
        %v289 = vrot.slane %v284, %v288
        %290 = vset.pattern.permute.xlu0 0
        %291 = vperm.xlu0 %290, %v289
        %v292 = vpop.permute.xlu0 %291
        %294 = vst [vmem:[%s209] sm:$0xff] %v292
      $region36: #{cosine_loss.1} parent=27 // pred_fallthru
        _
      %p295 = scmp.lt.s32.totalorder %s17, 1
      %s296 = scalar_select %p295, %s17, 1
      %s297 = smul.addr %s296, 8
      %s298 = scalar_lea.vmem %s2, %s297
      // Predicated region
      $region37: #{cosine_loss.1} parent=27 // pred_check
        %p299 = pneg %p107
      $region38: #{cosine_loss.1} parent=27 // pred_check_branch
        %301 = sbr.rel (%p299) target = $region40
      $region39: #{cosine_loss.1} parent=27 // pred_region
        _
      $region40: #{cosine_loss.1} parent=27 // pred_fallthru
        _
    $region28: #{cosine_loss.1} parent=5 // pred_fallthru
      _
    %p302 = scmp.le.s32.totalorder 2, %s8
    // Predicated region
    $region41: #{cosine_loss.1} parent=5 // pred_check
      %p303 = pneg %p302
    $region42: #{cosine_loss.1} parent=5 // pred_check_branch
      %305 = sbr.rel (%p303) target = $region44
    $region43: #{cosine_loss.1} parent=5 // pred_region
      %s306 = ssub.s32 %s8, 2
      // Predicated region
      $region45: #{cosine_loss.1} parent=43 // pred_check
        %p307 = pneg %p113
      $region46: #{cosine_loss.1} parent=43 // pred_check_branch
        %309 = sbr.rel (%p307) target = $region48
      $region47: #{cosine_loss.1} parent=43 // pred_region
        %p310 = scmp.lt.s32.totalorder %s19, 1
        %s311 = scalar_select %p310, %s19, 1
        %s312 = smul.addr %s311, 8
        %s313 = scalar_lea.vmem %s2, %s312
      $region48: #{cosine_loss.1} parent=43 // pred_fallthru
        _
    $region44: #{cosine_loss.1} parent=5 // pred_fallthru
      _
  $region6: #{cosine_loss.1} parent=0 // loop_footer
    %s12 = sadd.s32 1, %s8
  $region7: #{cosine_loss.1} parent=0 // loop_footer_branch
    %7 = sbr.rel target = $region3
  $region8: #{cosine_loss.1} parent=0 // loop_exit
    _

</llo_original>
